<compile_context>
chip_gen: v7x
topology: tpu7x:2x2x1
jax: 0.10.0
libtpu: 0.0.40
codegen_flags: <defaults>
</compile_context>

<pallas_src>
import functools

import jax
import jax.numpy as jnp
from jax.experimental import pallas as pl
from jax.experimental.pallas import tpu as pltpu

_CHUNK_LANES = 2048                     # lane width of in-kernel compute chunks
_VMEM_LIMIT_BYTES = 48 * 1024 * 1024    # safe on v7x (64 MiB phys), roomy on v5e/v6e


def _choose_tile_lanes(s, c, itemsize, target_block_bytes=4 * 1024 * 1024,
                       max_tl=128 * 1024):
    """Spatial (lane) tile: multiple of 128 (and of the compute chunk when
    larger), ~target_block_bytes of logits per block, never (much) larger
    than the spatial extent itself."""
    s_rounded = ((s + 127) // 128) * 128
    tl = target_block_bytes // max(1, c * itemsize)
    tl = (tl // 128) * 128
    tl = max(128, min(tl, s_rounded, max_tl))
    if tl > _CHUNK_LANES:
        tl = (tl // _CHUNK_LANES) * _CHUNK_LANES
    return int(tl)


def _focal_loss_kernel(x_ref, t_ref, *rest, gamma, s_total, tl, chunk,
                       tiles_per_p, p_split, has_alpha, ragged):
    if has_alpha:
        alpha_ref, o_ref = rest
    else:
        (o_ref,) = rest

    gi = pl.program_id(0)        # fused (batch, spatial-parallel) index
    si = pl.program_id(1)        # spatial tile index within this gi

    # The (1, 1, chunk) output block is the lane-partial accumulator; it is
    # resident across the whole si sweep (same block index), so HBM only sees
    # a few KB per gi, written back when gi changes.
    @pl.when(si == 0)
    def _():
        o_ref[...] = jnp.zeros_like(o_ref)

    if p_split > 1:
        pi = gi % p_split
    else:
        pi = 0
    block_base = (pi * tiles_per_p + si) * tl   # global lane offset of block

    if has_alpha:
        alpha_col = alpha_ref[...].astype(jnp.float32)   # (C, 1), hoisted
    gamma_f = float(gamma)

    def accumulate(x, t, chunk_base):
        # x: (C, L) f32 logits, classes on sublanes, spatial lane-dense.
        # t: (1, L) int32 target ids.  Accumulates a (1, L) loss into o_ref.
        c, l = x.shape

        mx = jnp.max(x, axis=0, keepdims=True)                    # (1, L)
        if ragged:
            lane = jax.lax.broadcasted_iota(jnp.int32, (1, l), 1) + chunk_base
            valid = lane < s_total
            z = jnp.where(valid, x - mx, 0.0)     # keep garbage out of exp
        else:
            z = x - mx
        ez = jnp.exp(z)                                           # (C, L)
        sumexp = jnp.sum(ez, axis=0, keepdims=True)               # (1, L)

        # One-hot gather of the target class along sublanes.
        row = jax.lax.broadcasted_iota(jnp.int32, (c, l), 0)
        onehot = row == t                                         # (C, L) bool
        z_t = jnp.sum(jnp.where(onehot, z, 0.0), axis=0, keepdims=True)

        logpt = z_t - jnp.log(sumexp)                             # (1, L)
        pt = jnp.exp(logpt)             # (1, L) EUP exp; cheaper than ez_t path
        if has_alpha:
            at = jnp.sum(jnp.where(onehot, alpha_col, 0.0), axis=0,
                         keepdims=True)
            logpt = logpt * at                                    # alpha weight

        one_m_pt = jnp.maximum(1.0 - pt, 0.0)        # clamp: pt may round > 1
        if gamma_f == 0.0:
            w = jnp.ones_like(one_m_pt)
        elif gamma_f.is_integer() and 0 < gamma_f <= 8:
            # Integer-gamma fast path: plain VPU multiplies (no exp/log pow).
            w = one_m_pt
            for _ in range(int(gamma_f) - 1):
                w = w * one_m_pt
        else:
            w = one_m_pt ** gamma_f

        loss = -w * logpt
        if ragged:
            loss = jnp.where(valid, loss, 0.0)
        o_ref[0] += loss

    n_chunks = tl // chunk
    if n_chunks == 1:
        accumulate(x_ref[0].astype(jnp.float32),
                   t_ref[0].astype(jnp.int32),
                   block_base)
    else:
        # Inner chunk loop: big DMA blocks, small vreg-resident temporaries.
        @pl.loop(0, n_chunks)
        def _(ci):
            start = pl.multiple_of(ci * chunk, 128)
            accumulate(x_ref[0, :, pl.ds(start, chunk)].astype(jnp.float32),
                       t_ref[0, :, pl.ds(start, chunk)].astype(jnp.int32),
                       block_base + start)


def focal_loss(x, target, gamma=2.0, alpha=None, size_average=True, tl=None):
    """Focal loss matching the PyTorch module's forward semantics.

    x: (N, C, H, W) logits (or (M, C)); target: integer class ids, one per
    spatial position.
    """
    if x.ndim > 2:
        n, c = x.shape[0], x.shape[1]
        x3 = x.reshape(n, c, -1)                  # (N, C, S): free, no transpose
    else:
        # TODO(synk): (M, C) inputs pay one extra HBM transpose pass here; a
        # native (TM, C)-blocked variant would avoid it.
        c = x.shape[-1]
        n = 1
        x3 = x.T[None]                            # (1, C, M)
    s_total = x3.shape[-1]
    # int16 target stream (widened in-kernel before the compare).
    t3 = target.reshape(n, 1, s_total).astype(jnp.int16)

    if tl is None:
        tl = _choose_tile_lanes(s_total, c, x3.dtype.itemsize)
    else:
        tl = max(128, (int(tl) // 128) * 128)
    chunk = _CHUNK_LANES if (tl > _CHUNK_LANES and tl % _CHUNK_LANES == 0) else tl

    num_s_tiles = pl.cdiv(s_total, tl)
    ragged = (s_total % tl) != 0
    # v7x megacore: with a single batch row, split the spatial sweep into two
    # parallel grid entries so the second TensorCore is not idle.
    p_split = 2 if (n == 1 and num_s_tiles >= 2 and num_s_tiles % 2 == 0) else 1
    tiles_per_p = num_s_tiles // p_split
    grid = (n * p_split, tiles_per_p)

    if p_split == 1:
        def in_map(gi, si):
            return (gi, 0, si)
    else:
        def in_map(gi, si):
            return (gi // p_split, 0, (gi % p_split) * tiles_per_p + si)

    inputs = [x3, t3]
    in_specs = [
        pl.BlockSpec((1, c, tl), in_map),
        pl.BlockSpec((1, 1, tl), in_map),
    ]

    has_alpha = alpha is not None
    if has_alpha:
        if isinstance(alpha, (float, int)):
            # Mirrors the PyTorch module: scalar alpha -> [alpha, 1 - alpha].
            assert c == 2, "scalar alpha assumes a binary (C == 2) problem"
            alpha_vec = jnp.array([alpha, 1.0 - alpha], dtype=jnp.float32)
        else:
            alpha_vec = jnp.asarray(alpha, dtype=jnp.float32).reshape(-1)
        inputs.append(alpha_vec.reshape(c, 1))
        in_specs.append(pl.BlockSpec((c, 1), lambda gi, si: (0, 0)))

    kernel = functools.partial(
        _focal_loss_kernel,
        gamma=float(gamma), s_total=s_total, tl=tl, chunk=chunk,
        tiles_per_p=tiles_per_p, p_split=p_split,
        has_alpha=has_alpha, ragged=ragged)

    partials = pl.pallas_call(
        kernel,
        out_shape=jax.ShapeDtypeStruct((n * p_split, 1, chunk), jnp.float32),
        grid_spec=pltpu.PrefetchScalarGridSpec(
            num_scalar_prefetch=0,
            grid=grid,
            in_specs=in_specs,
            out_specs=pl.BlockSpec((1, 1, chunk), lambda gi, si: (gi, 0, 0)),
        ),
        compiler_params=pltpu.CompilerParams(
            dimension_semantics=("parallel", "arbitrary"),
            vmem_limit_bytes=_VMEM_LIMIT_BYTES),
    )(*inputs)

    total = jnp.sum(partials)          # tiny (n*P, 1, chunk) reduce in XLA
    if size_average:
        total = total / jnp.float32(n * s_total)
    return total


def _focal_loss_ref(x, target, gamma=2.0, alpha=None, size_average=True):
    n, c = x.shape[0], x.shape[1]
    x2 = jnp.transpose(x.reshape(n, c, -1), (0, 2, 1)).reshape(-1, c)
    t = target.reshape(-1)
    logp = jax.nn.log_softmax(x2, axis=1)
    logpt = jnp.take_along_axis(logp, t[:, None], axis=1)[:, 0]
    pt = jnp.exp(logpt)
    if alpha is not None:
        av = jnp.asarray(alpha, dtype=x2.dtype)
        logpt = logpt * av[t]
    loss = -((1.0 - pt) ** gamma) * logpt
    return loss.mean() if size_average else loss.sum()


if __name__ == "__main__":
    key = jax.random.PRNGKey(0)
    k1, k2, k3, k4 = jax.random.split(key, 4)

    # 1) module defaults (gamma=2, alpha=None, mean) on an NCHW batch.
    N, C, H, W = 2, 4, 16, 16
    x = jax.random.normal(k1, (N, C, H, W), dtype=jnp.float32)
    target = jax.random.randint(k2, (N, H, W), 0, C, dtype=jnp.int32)
    out = jax.block_until_ready(focal_loss(x, target))
    ref = _focal_loss_ref(x, target)
    assert jnp.allclose(out, ref, rtol=1e-5, atol=1e-5), (out, ref)

    # 2) alpha-weighted / sum-reduction path.
    alpha = [0.25, 0.75, 0.5, 1.0]
    out2 = jax.block_until_ready(
        focal_loss(x, target, gamma=2, alpha=alpha, size_average=False))
    ref2 = _focal_loss_ref(x, target, gamma=2, alpha=alpha, size_average=False)
    assert jnp.allclose(out2, ref2, rtol=1e-5, atol=1e-3), (out2, ref2)

    # 3) single-image input with two spatial tiles: exercises the megacore
    #    spatial split (p_split=2) and the multi-tile accumulator.
    x1 = jax.random.normal(k3, (1, C, 64, 64), dtype=jnp.float32)
    t1 = jax.random.randint(k4, (1, 64, 64), 0, C, dtype=jnp.int32)
    out3 = jax.block_until_ready(focal_loss(x1, t1, tl=2048))
    ref3 = _focal_loss_ref(x1, t1)
    assert jnp.allclose(out3, ref3, rtol=1e-5, atol=1e-5), (out3, ref3)

    # 4) default tiling on a 64x64 batch of 2: exercises the in-kernel chunk
    #    loop (tl=4096, chunk=2048).
    x2 = jax.random.normal(k3, (2, C, 64, 64), dtype=jnp.float32)
    t2 = jax.random.randint(k4, (2, 64, 64), 0, C, dtype=jnp.int32)
    out4 = jax.block_until_ready(focal_loss(x2, t2))
    ref4 = _focal_loss_ref(x2, t2)
    assert jnp.allclose(out4, ref4, rtol=1e-5, atol=1e-5), (out4, ref4)

    print("KERNEL_OK")
</pallas_src>

<mosaic_0001>
module attributes {stable_mosaic.version = 11 : i64} {
  func.func @_focal_loss_kernel(%arg0: i32, %arg1: i32, %arg2: memref<1x4x256xf32, #tpu.memory_space<vmem>>, %arg3: memref<1x1x256xi16, #tpu.memory_space<vmem>>, %arg4: memref<1x1x256xf32, #tpu.memory_space<vmem>>) attributes {dimension_semantics = [#tpu.dimension_semantics<parallel>, #tpu.dimension_semantics<arbitrary>], iteration_bounds = array<i64: 2, 1>, scalar_prefetch = 0 : i64, scratch_operands = 0 : i64, tpu.core_type = #tpu.core_type<tc>, window_params = [{transform_indices = @transform_0, window_bounds = array<i64: 1, 4, 256>}, {transform_indices = @transform_1, window_bounds = array<i64: 1, 1, 256>}, {transform_indices = @transform_2, window_bounds = array<i64: 1, 1, 256>}]} {
    %c0_i32 = arith.constant 0 : i32
    %0 = arith.cmpi eq, %arg1, %c0_i32 : i32
    %1 = arith.extui %0 : i1 to i32
    %c0_i32_0 = arith.constant 0 : i32
    %2 = arith.cmpi ne, %1, %c0_i32_0 : i32
    scf.if %2 {
      %cst_18 = arith.constant 0.000000e+00 : f32
      %39 = vector.broadcast %cst_18 : f32 to vector<1x1x256xf32>
      %c0_19 = arith.constant 0 : index
      %c0_20 = arith.constant 0 : index
      %c0_21 = arith.constant 0 : index
      %40 = vector.load %arg4[%c0_19, %c0_20, %c0_21] : memref<1x1x256xf32, #tpu.memory_space<vmem>>, vector<1x1x256xf32>
      tpu.vector_store %arg4[%c0_19, %c0_20, %c0_21], %39 {strides = array<i32>} : memref<1x1x256xf32, #tpu.memory_space<vmem>>, vector<1x1x256xf32>,
    } else {
    }
    %c0 = arith.constant 0 : index
    %c0_1 = arith.constant 0 : index
    %c0_2 = arith.constant 0 : index
    %3 = vector.load %arg2[%c0, %c0_1, %c0_2] : memref<1x4x256xf32, #tpu.memory_space<vmem>>, vector<1x4x256xf32>
    %4 = vector.shape_cast %3 : vector<1x4x256xf32> to vector<4x256xf32>
    %c0_3 = arith.constant 0 : index
    %c0_4 = arith.constant 0 : index
    %c0_5 = arith.constant 0 : index
    %5 = vector.load %arg3[%c0_3, %c0_4, %c0_5] : memref<1x1x256xi16, #tpu.memory_space<vmem>>, vector<1x1x256xi16>
    %6 = vector.shape_cast %5 : vector<1x1x256xi16> to vector<1x256xi16>
    %7 = arith.extsi %6 : vector<1x256xi16> to vector<1x256xi32>
    %cst = arith.constant dense<0xFF800000> : vector<256xf32>
    %8 = vector.multi_reduction <maximumf>, %4, %cst [0] : vector<4x256xf32> to vector<256xf32>
    %9 = vector.shape_cast %8 : vector<256xf32> to vector<1x256xf32>
    %10 = vector.broadcast %9 : vector<1x256xf32> to vector<4x256xf32>
    %11 = arith.subf %4, %10 : vector<4x256xf32>
    %12 = math.exp %11 : vector<4x256xf32>
    %cst_6 = arith.constant dense<0.000000e+00> : vector<256xf32>
    %13 = vector.multi_reduction <add>, %12, %cst_6 [0] : vector<4x256xf32> to vector<256xf32>
    %14 = vector.shape_cast %13 : vector<256xf32> to vector<1x256xf32>
    %15 = tpu.iota {dimensions = array<i32: 0>} : vector<4x256xi32>
    %16 = vector.broadcast %7 : vector<1x256xi32> to vector<4x256xi32>
    %17 = arith.cmpi eq, %15, %16 : vector<4x256xi32>
    %cst_7 = arith.constant 0.000000e+00 : f32
    %18 = vector.broadcast %cst_7 : f32 to vector<4x256xf32>
    %19 = arith.select %17, %11, %18 : vector<4x256xi1>, vector<4x256xf32>
    %cst_8 = arith.constant dense<0.000000e+00> : vector<256xf32>
    %20 = vector.multi_reduction <add>, %19, %cst_8 [0] : vector<4x256xf32> to vector<256xf32>
    %21 = vector.shape_cast %20 : vector<256xf32> to vector<1x256xf32>
    %22 = math.log %14 : vector<1x256xf32>
    %23 = arith.subf %21, %22 : vector<1x256xf32>
    %24 = math.exp %23 : vector<1x256xf32>
    %cst_9 = arith.constant 1.000000e+00 : f32
    %25 = vector.broadcast %cst_9 : f32 to vector<1x256xf32>
    %26 = arith.subf %25, %24 : vector<1x256xf32>
    %cst_10 = arith.constant 0.000000e+00 : f32
    %27 = vector.broadcast %cst_10 : f32 to vector<1x256xf32>
    %28 = arith.maximumf %26, %27 : vector<1x256xf32>
    %29 = arith.mulf %28, %28 : vector<1x256xf32>
    %cst_11 = arith.constant 0.000000e+00 : f32
    %30 = vector.broadcast %cst_11 : f32 to vector<1x256xf32>
    %31 = arith.subf %30, %29 : vector<1x256xf32>
    %32 = arith.mulf %31, %23 : vector<1x256xf32>
    %c0_12 = arith.constant 0 : index
    %c0_13 = arith.constant 0 : index
    %c0_14 = arith.constant 0 : index
    %33 = vector.load %arg4[%c0_12, %c0_13, %c0_14] : memref<1x1x256xf32, #tpu.memory_space<vmem>>, vector<1x1x256xf32>
    %34 = vector.shape_cast %33 : vector<1x1x256xf32> to vector<1x256xf32>
    %35 = arith.addf %34, %32 : vector<1x256xf32>
    %c0_15 = arith.constant 0 : index
    %c0_16 = arith.constant 0 : index
    %c0_17 = arith.constant 0 : index
    %36 = vector.load %arg4[%c0_15, %c0_16, %c0_17] : memref<1x1x256xf32, #tpu.memory_space<vmem>>, vector<1x1x256xf32>
    %37 = vector.shape_cast %36 : vector<1x1x256xf32> to vector<1x256xf32>
    %38 = vector.shape_cast %35 : vector<1x256xf32> to vector<1x1x256xf32>
    tpu.vector_store %arg4[%c0_15, %c0_16, %c0_17], %38 {strides = array<i32>} : memref<1x1x256xf32, #tpu.memory_space<vmem>>, vector<1x1x256xf32>,
    return
  }
  func.func @transform_0(%arg0: i32, %arg1: i32) -> (i32, i32, i32) {
    %c0_i32 = arith.constant 0 : i32
    %c0_i32_0 = arith.constant 0 : i32
    return %arg0, %c0_i32, %arg1 : i32, i32, i32
  }
  func.func @transform_1(%arg0: i32, %arg1: i32) -> (i32, i32, i32) {
    %c0_i32 = arith.constant 0 : i32
    %c0_i32_0 = arith.constant 0 : i32
    return %arg0, %c0_i32, %arg1 : i32, i32, i32
  }
  func.func @transform_2(%arg0: i32, %arg1: i32) -> (i32, i32, i32) {
    %c0_i32 = arith.constant 0 : i32
    %c0_i32_0 = arith.constant 0 : i32
    %c0_i32_1 = arith.constant 0 : i32
    return %arg0, %c0_i32, %c0_i32_0 : i32, i32, i32
  }
}

</mosaic_0001>

<llo_original>
// kernel: tpu_custom_call.1
$region0: #{tpu_custom_call.1}
  #allocation0 [shape = 'u32[]', space=smem, size = 0x4, offset = 0x4, fixed_abs, tag = 'smem constant byte address 0x4 - core index']
  #allocation1 [shape = 'u32[144,128]{1,0:T(1,128)}', space=vmem, size = 0x12000, scoped, tag = 'internal scratch']
  %s0 = inlined_call_operand.hbm [shape: f32[2,4,256], index: 0, kind: input, shape index: {}]
  %s1 = inlined_call_operand.vmem [shape: s16[2,1,256], index: 1, kind: input, shape index: {}]
  %s2 = inlined_call_operand.hbm [shape: f32[2,1,256], index: 2, kind: output, shape index: {}]
  %s3 = sld [smem:[#allocation0]]
  $region49: #{tpu_custom_call.1} parent=0
    _
  %s5 = ssub.s32 1, %s3
  %s6 = scalar_select 0, %s5, %s3
  $region1: #{tpu_custom_call.1} parent=0
    #allocation2 [shape = 'u8[8192]{0}', space=vmem, size = 0x2000, scoped, tag = 'input window, operand 0']
    #allocation3 [shape = 's32[2]{0}', space=sflag, size = 0x8, scoped, tag = 'scoped memory for tpu_custom_call.1']
    #allocation4 [shape = 's32[2]{0}', space=sflag, size = 0x8, scoped, tag = 'scoped memory for tpu_custom_call.1']
    #allocation5 [shape = 'u8[2048]{0}', space=vmem, size = 0x800, scoped, tag = 'output window, operand 0']
    %7 = vsyncpa [#allocation3], 0
    %s8 = scalar_lea.sflag [#allocation3], 1
    %9 = vsyncpa %s8, 0
    %10 = vsyncpa [#allocation4], 0
    %s11 = scalar_lea.sflag [#allocation4], 1
    %12 = vsyncpa %s11, 0
    loop: start=0, step=1, limit=4
    $region2: #{tpu_custom_call.1} parent=1 // loop_pre_header
      _
    $region3: #{tpu_custom_call.1} parent=1 // loop_header
      %s14 = sphi 0, %s18
      %p15 = scmp.ge.s32.totalorder %s14, 4
      %s21 = sphi 0, %s33
      %s22 = sphi 0, %s29
      %s23 = sphi 0, %s21
      %s24 = sphi 0, %s22
      %s25 = sphi 0, %s23
      %s26 = sphi 0, %s24
      %s38 = sphi 0, %s40
      %s41 = sphi 0, %s38
      %s42 = sphi 0, %s41
      %s58 = sphi 0, %s42
      %s66 = sphi 0, %s68
      %s69 = sphi 0, %s66
      %s70 = sphi 0, %s69
      %s86 = sphi 0, %s70
      %s92 = sphi 0, %s94
      %s95 = sphi 0, %s92
      %s96 = sphi 0, %s95
      %s112 = sphi 0, %s96
    $region4: #{tpu_custom_call.1} parent=1 // loop_header_branch
      %17 = sbr.rel (%p15) target = $region8
    $region5: #{tpu_custom_call.1} parent=1 // loop_body
      %s19 = ssub.s32 %s14, 1
      %s20 = ssub.s32 %s14, 2
      %s27 = sadd.s32 1, %s22
      %p28 = scmp.ge.s32.totalorder %s27, 1
      %s29 = scalar_select %p28, 0, %s27
      %s30 = sadd.s32 1, %s21
      %s31 = scalar_select %p28, %s30, %s21
      %p32 = scmp.ge.s32.totalorder %s31, 2
      %s33 = scalar_select %p32, 0, %s31
      %s34 = ssub.s32 %s21, %s33
      %s35 = ssub.s32 %s22, %s29
      %s36 = sor.u32 %s34, %s35
      %p37 = scmp.eq.s32.totalorder %s36, 0
      %s39 = sadd.s32 %s38, 1
      %s40 = scalar_select %p37, %s38, %s39
      %p43 = pneg %p37
      %p44 = scmp.eq.s32.totalorder %s14, 1
      %p45 = por %p43, %p44
      %p46 = scmp.ne.s32.totalorder %s38, %s41
      %p47 = scmp.eq.s32.totalorder %s14, 0
      %p48 = por %p46, %p47
      %p49 = scmp.ne.s32.totalorder %s38, %s41
      %p50 = scmp.eq.s32.totalorder %s19, 1
      %p51 = por %p49, %p50
      %p52 = scmp.ne.s32.totalorder %s41, %s42
      %p53 = scmp.eq.s32.totalorder %s19, 0
      %p54 = por %p52, %p53
      %p55 = scmp.ne.s32.totalorder %s41, %s42
      %p56 = scmp.eq.s32.totalorder %s20, 1
      %p57 = por %p55, %p56
      %p59 = scmp.ne.s32.totalorder %s42, %s58
      %p60 = scmp.eq.s32.totalorder %s20, 0
      %p61 = por %p59, %p60
      %s62 = ssub.s32 %s21, %s33
      %s63 = ssub.s32 %s22, %s29
      %s64 = sor.u32 %s62, %s63
      %p65 = scmp.eq.s32.totalorder %s64, 0
      %s67 = sadd.s32 %s66, 1
      %s68 = scalar_select %p65, %s66, %s67
      %p71 = pneg %p65
      %p72 = scmp.eq.s32.totalorder %s14, 1
      %p73 = por %p71, %p72
      %p74 = scmp.ne.s32.totalorder %s66, %s69
      %p75 = scmp.eq.s32.totalorder %s14, 0
      %p76 = por %p74, %p75
      %p77 = scmp.ne.s32.totalorder %s66, %s69
      %p78 = scmp.eq.s32.totalorder %s19, 1
      %p79 = por %p77, %p78
      %p80 = scmp.ne.s32.totalorder %s69, %s70
      %p81 = scmp.eq.s32.totalorder %s19, 0
      %p82 = por %p80, %p81
      %p83 = scmp.ne.s32.totalorder %s69, %s70
      %p84 = scmp.eq.s32.totalorder %s20, 1
      %p85 = por %p83, %p84
      %p87 = scmp.ne.s32.totalorder %s70, %s86
      %p88 = scmp.eq.s32.totalorder %s20, 0
      %p89 = por %p87, %p88
      %s90 = ssub.s32 %s21, %s33
      %p91 = scmp.eq.s32.totalorder %s90, 0
      %s93 = sadd.s32 %s92, 1
      %s94 = scalar_select %p91, %s92, %s93
      %p97 = pneg %p91
      %p98 = scmp.eq.s32.totalorder %s14, 1
      %p99 = por %p97, %p98
      %p100 = scmp.ne.s32.totalorder %s92, %s95
      %p101 = scmp.eq.s32.totalorder %s14, 0
      %p102 = por %p100, %p101
      %p103 = scmp.ne.s32.totalorder %s92, %s95
      %p104 = scmp.eq.s32.totalorder %s19, 1
      %p105 = por %p103, %p104
      %p106 = scmp.ne.s32.totalorder %s95, %s96
      %p107 = scmp.eq.s32.totalorder %s19, 0
      %p108 = por %p106, %p107
      %p109 = scmp.ne.s32.totalorder %s95, %s96
      %p110 = scmp.eq.s32.totalorder %s20, 1
      %p111 = por %p109, %p110
      %p113 = scmp.ne.s32.totalorder %s96, %s112
      %p114 = scmp.eq.s32.totalorder %s20, 0
      %p115 = por %p113, %p114
      %p116 = scmp.le.s32.totalorder 1, %s14
      %p117 = scmp.lt.s32.totalorder %s14, 3
      %p118 = pnand %p116, %p117
      %p119 = pneg %p118
      // Predicated region
      $region9: #{tpu_custom_call.1} parent=5 // pred_check
        _
      $region10: #{tpu_custom_call.1} parent=5 // pred_check_branch
        %121 = sbr.rel (%p118) target = $region12
      $region11: #{tpu_custom_call.1} parent=5 // pred_region
        %s122 = ssub.s32 %s14, 1
      $region12: #{tpu_custom_call.1} parent=5 // pred_fallthru
        _
      %p123 = scmp.lt.s32.totalorder %s14, 2
      // Predicated region
      $region13: #{tpu_custom_call.1} parent=5 // pred_check
        %p124 = pneg %p123
      $region14: #{tpu_custom_call.1} parent=5 // pred_check_branch
        %126 = sbr.rel (%p124) target = $region16
      $region15: #{tpu_custom_call.1} parent=5 // pred_region
        // Predicated region
        $region17: #{tpu_custom_call.1} parent=15 // pred_check
          %p127 = pneg %p48
        $region18: #{tpu_custom_call.1} parent=15 // pred_check_branch
          %129 = sbr.rel (%p127) target = $region20
        $region19: #{tpu_custom_call.1} parent=15 // pred_region
          %s130 = sand.u32 %s38, 1
          %s131 = scalar_lea.sflag [#allocation3], %s130
          %s132 = sand.u32 %s38, 1
          %s133 = smul.addr %s132, 8
          %s134 = scalar_lea.vmem [#allocation2], %s133
          %s135 = smul.u32 2, %s22
          %s137 = ssub.s32 128, 128
          %138 = vsyncadd %s131, %s137
          %s139 = smul.addr %s21, 2
          %s140 = sadd.s32 %s135, %s139
          %s141 = smul.addr %s140, 64
          %s142 = scalar_lea.hbm %s0, %s141
          %s144 = sshll.u32 %s134, 4
          %s145 = int_to_ptr.vmem [resolvable:$true] %s144
          %147 = dma.hbm_to_vmem [thread:$0]  %s142, 128, %s145, %s131
        $region20: #{tpu_custom_call.1} parent=15 // pred_fallthru
          _
        // Predicated region
        $region21: #{tpu_custom_call.1} parent=15 // pred_check
          %p148 = pneg %p76
        $region22: #{tpu_custom_call.1} parent=15 // pred_check_branch
          %150 = sbr.rel (%p148) target = $region24
        $region23: #{tpu_custom_call.1} parent=15 // pred_region
          %s151 = smul.u32 2, %s22
          %p152 = scmp.lt.s32.totalorder %s21, 1
          %s153 = scalar_select %p152, %s21, 1
          %p154 = scmp.lt.s32.totalorder %s151, 1
          %s155 = scalar_select %p154, %s151, 1
          %s156 = smul.addr %s153, 2
          %s157 = sadd.s32 %s155, %s156
          %s158 = scalar_lea.vmem %s1, %s157
          %s159 = smul.u32 2, %s22
        $region24: #{tpu_custom_call.1} parent=15 // pred_fallthru
          _
      $region16: #{tpu_custom_call.1} parent=5 // pred_fallthru
        _
      %p160 = scmp.le.s32.totalorder 1, %s14
      %p161 = scmp.lt.s32.totalorder %s14, 3
      %p162 = pnand %p160, %p161
      %p163 = pneg %p162
      // Predicated region
      $region25: #{tpu_custom_call.1} parent=5 // pred_check
        _
      $region26: #{tpu_custom_call.1} parent=5 // pred_check_branch
        %165 = sbr.rel (%p162) target = $region28
      $region27: #{tpu_custom_call.1} parent=5 // pred_region
        %s166 = ssub.s32 %s14, 1
        %s167 = sand.u32 %s41, 1
        %s168 = scalar_lea.sflag [#allocation3], %s167
        %s169 = sand.u32 %s41, 1
        %s170 = smul.addr %s169, 8
        %s171 = scalar_lea.vmem [#allocation2], %s170
        // Predicated region
        $region29: #{tpu_custom_call.1} parent=27 // pred_check
          %p172 = pneg %p54
        $region30: #{tpu_custom_call.1} parent=27 // pred_check_branch
          %174 = sbr.rel (%p172) target = $region32
        $region31: #{tpu_custom_call.1} parent=27 // pred_region
          %175 = dma.done %s168, 128
        $region32: #{tpu_custom_call.1} parent=27 // pred_fallthru
          _
        %s176 = sand.u32 %s41, 1
        %s177 = scalar_lea.sflag [#allocation3], %s176
        %s178 = sand.u32 %s41, 1
        %s179 = smul.addr %s178, 8
        %s180 = scalar_lea.vmem [#allocation2], %s179
        %p181 = pneg %p54
        %p182 = pneg %p51
        %s183 = smul.u32 2, %s24
        %p184 = scmp.lt.s32.totalorder %s23, 1
        %s185 = scalar_select %p184, %s23, 1
        %p186 = scmp.lt.s32.totalorder %s183, 1
        %s187 = scalar_select %p186, %s183, 1
        %s188 = smul.addr %s185, 2
        %s189 = sadd.s32 %s187, %s188
        %s190 = scalar_lea.vmem %s1, %s189
        %p191 = pneg %p82
        %p192 = pneg %p79
        %p193 = pneg %p108
        %p194 = pneg %p105
        %s195 = sand.u32 %s95, 1
        %s196 = scalar_lea.sflag [#allocation4], %s195
        %s197 = sand.u32 %s95, 1
        %s198 = smul.addr %s197, 2
        %s199 = scalar_lea.vmem [#allocation5], %s198
        %s200 = smul.u32 2, %s24
        %s201 = smul.u32 2, %s24
        %p202 = scmp.lt.s32.totalorder %s23, 1
        %s203 = scalar_select %p202, %s23, 1
        %p204 = scmp.lt.s32.totalorder %s201, 1
        %s205 = scalar_select %p204, %s201, 1
        %s206 = smul.addr %s203, 2
        %s207 = sadd.s32 %s205, %s206
        %s208 = scalar_lea.vmem %s1, %s207
        %s209 = smul.u32 2, %s24
        %p210 = scmp.eq.s32.totalorder %s24, 0
        // Predicated region
        $region33: #{tpu_custom_call.1} parent=27 // pred_check
          %p211 = pneg %p210
        $region34: #{tpu_custom_call.1} parent=27 // pred_check_branch
          %213 = sbr.rel (%p211) target = $region36
        $region35: #{tpu_custom_call.1} parent=27 // pred_region
          %v214 = vlaneseq
          %vm215 = vcmp.ge.s32.totalorder %v214, 0
          %vm216 = vcmp.lt.s32.totalorder %v214, 256
          %vm217 = vmand %vm215, %vm216
          %218 = vst.msk [vmem:[%s199] sm:$0x3] %vm217, 0.0
        $region36: #{tpu_custom_call.1} parent=27 // pred_fallthru
          _
        %v219 = vld [vmem:[%s171] sm:$0xff]
        %v220 = vld [vmem:[%s208] sm:$0x3]
        %v221 = vunpack.c.l.b16 %v220
        %v223 = vcombine.high %v219, %v219
        %vm225 = vcmask 1043456
        %v226 = vsel %vm225, %v219, -inf
        %v227 = vrot.slane %v226, 4
        %v228 = vmax.f32 %v226, %v227
        %v229 = vrot.slane %v228, 2
        %v230 = vmax.f32 %v228, %v229
        %v231 = vrot.slane %v230, 1
        %v232 = vmax.f32 %v230, %v231
        %v233 = vsel %vm225, %v223, -inf
        %v234 = vrot.slane %v233, 4
        %v235 = vmax.f32 %v233, %v234
        %v236 = vrot.slane %v235, 2
        %v237 = vmax.f32 %v235, %v236
        %v238 = vrot.slane %v237, 1
        %v239 = vmax.f32 %v237, %v238
        %v242 = vcombine.low %v232, %v239
        %v244 = vsub.f32 %v219, %v242
        %v245 = vmul.f32 %v244, 1.442695
        %v246 = vpow.pop %v245
        %v248 = vcombine.high %v246, %v246
        %v250 = vsel %vm225, %v246, 0.0
        %v251 = vrot.slane %v250, 4
        %v252 = vadd.f32 %v250, %v251
        %v253 = vrot.slane %v252, 2
        %v254 = vadd.f32 %v252, %v253
        %v255 = vrot.slane %v254, 1
        %v256 = vadd.f32 %v254, %v255
        %v257 = vsel %vm225, %v248, 0.0
        %v258 = vrot.slane %v257, 4
        %v259 = vadd.f32 %v257, %v258
        %v260 = vrot.slane %v259, 2
        %v261 = vadd.f32 %v259, %v260
        %v262 = vrot.slane %v261, 1
        %v263 = vadd.f32 %v261, %v262
        %v264 = vlaneseq
        %v265 = vshrl.u32 %v264, 7
        %v266 = vlaneseq
        %v267 = vshrl.u32 %v266, 7
        %v268 = vsub.s32 0, %v267
        %v269 = vrot.slane %v221, %v268
        %v270 = vlaneseq
        %v271 = vshrl.u32 %v270, 7
        %v272 = vsub.s32 2, %v271
        %v273 = vrot.slane %v221, %v272
        %v274 = vlaneseq
        %v275 = vshrl.u32 %v274, 7
        %v276 = vsub.s32 0, %v275
        %v277 = vrot.slane %v269, %v276
        %v278 = vlaneseq
        %v279 = vshrl.u32 %v278, 7
        %v280 = vsub.s32 0, %v279
        %v281 = vrot.slane %v273, %v280
        %vm282 = vcmp.eq.s32.totalorder %v265, %v277
        %vm283 = vcmp.eq.s32.totalorder %v265, %v281
        %v285 = vcombine.high %v244, %v244
        %v287 = vsel %vm282, %v244, 0.0
        %v288 = vsel %vm283, %v285, 0.0
        %v289 = vsel %vm225, %v287, 0.0
        %v290 = vrot.slane %v289, 4
        %v291 = vadd.f32 %v289, %v290
        %v292 = vrot.slane %v291, 2
        %v293 = vadd.f32 %v291, %v292
        %v294 = vrot.slane %v293, 1
        %v295 = vadd.f32 %v293, %v294
        %v296 = vsel %vm225, %v288, 0.0
        %v297 = vrot.slane %v296, 4
        %v298 = vadd.f32 %v296, %v297
        %v299 = vrot.slane %v298, 2
        %v300 = vadd.f32 %v298, %v299
        %v301 = vrot.slane %v300, 1
        %v302 = vadd.f32 %v300, %v301
        %v303 = vlog2.pop %v256
        %v304 = vmul.f32 %v303, 0.6931472
        %v305 = vlog2.pop %v263
        %v306 = vmul.f32 %v305, 0.6931472
        %v307 = vsub.f32 %v295, %v304
        %v308 = vsub.f32 %v302, %v306
        %v309 = vmul.f32 %v307, 1.442695
        %v310 = vpow.pop %v309
        %v311 = vmul.f32 %v308, 1.442695
        %v312 = vpow.pop %v311
        %v313 = vsub.f32 1.0, %v310
        %v314 = vsub.f32 1.0, %v312
        %v315 = vmax.f32 %v313, 0.0
        %v316 = vmax.f32 %v314, 0.0
        %v317 = vmul.f32 %v315, %v315
        %v318 = vmul.f32 %v316, %v316
        %v319 = vsub.f32 0.0, %v317
        %v320 = vsub.f32 0.0, %v318
        %v321 = vmul.f32 %v319, %v307
        %v322 = vmul.f32 %v320, %v308
        %v323 = vld [vmem:[%s199] sm:$0x3]
        %v326 = vcombine.low %v321, %v322
        %v328 = vunpack.c.l.s4 1966171168
        %v329 = vunpack.c.0.s8 %v328
        %v330 = vlaneseq
        %v331 = vshrl.u32 %v330, 7
        %v332 = vsub.s32 %v329, %v331
        %v333 = vrot.slane %v326, %v332
        %v335 = vunpack.c.l.s4 1966171168
        %v336 = vunpack.c.0.s8 %v335
        %v337 = vlaneseq
        %v338 = vshrl.u32 %v337, 7
        %v339 = vsub.s32 %v336, %v338
        %v340 = vrot.slane %v333, %v339
        %v342 = vadd.f32 %v323, %v340
        %v343 = vlaneseq
        %vm344 = vcmp.ge.s32.totalorder %v343, 0
        %vm345 = vcmp.lt.s32.totalorder %v343, 256
        %vm346 = vmand %vm344, %vm345
        %347 = vst.msk [vmem:[%s199] sm:$0x3] %vm346, %v342
        %s348 = sand.u32 %s95, 1
        %s349 = scalar_lea.sflag [#allocation4], %s348
        %s350 = sand.u32 %s95, 1
        %s351 = smul.addr %s350, 2
        %s352 = scalar_lea.vmem [#allocation5], %s351
        // Predicated region
        $region37: #{tpu_custom_call.1} parent=27 // pred_check
          %p353 = pneg %p105
        $region38: #{tpu_custom_call.1} parent=27 // pred_check_branch
          %355 = sbr.rel (%p353) target = $region40
        $region39: #{tpu_custom_call.1} parent=27 // pred_region
          %s357 = ssub.s32 32, 32
          %358 = vsyncadd %s349, %s357
          %s359 = smul.addr %s23, 2
          %s360 = smul.addr %s359, 16
          %s361 = scalar_lea.hbm %s2, %s360
          %s363 = sshll.u32 %s352, 4
          %s364 = int_to_ptr.vmem [resolvable:$true] %s363
          %366 = dma.vmem_to_hbm [thread:$0]  %s364, 32, %s361, %s349
        $region40: #{tpu_custom_call.1} parent=27 // pred_fallthru
          _
      $region28: #{tpu_custom_call.1} parent=5 // pred_fallthru
        _
      %p367 = scmp.le.s32.totalorder 2, %s14
      // Predicated region
      $region41: #{tpu_custom_call.1} parent=5 // pred_check
        %p368 = pneg %p367
      $region42: #{tpu_custom_call.1} parent=5 // pred_check_branch
        %370 = sbr.rel (%p368) target = $region44
      $region43: #{tpu_custom_call.1} parent=5 // pred_region
        %s371 = ssub.s32 %s14, 2
        // Predicated region
        $region45: #{tpu_custom_call.1} parent=43 // pred_check
          %p372 = pneg %p111
        $region46: #{tpu_custom_call.1} parent=43 // pred_check_branch
          %374 = sbr.rel (%p372) target = $region48
        $region47: #{tpu_custom_call.1} parent=43 // pred_region
          %s375 = sand.u32 %s96, 1
          %s376 = scalar_lea.sflag [#allocation4], %s375
          %s377 = sand.u32 %s96, 1
          %s378 = smul.addr %s377, 2
          %s379 = scalar_lea.vmem [#allocation5], %s378
          %380 = dma.done %s376, 32
        $region48: #{tpu_custom_call.1} parent=43 // pred_fallthru
          _
      $region44: #{tpu_custom_call.1} parent=5 // pred_fallthru
        _
    $region6: #{tpu_custom_call.1} parent=1 // loop_footer
      %s18 = sadd.s32 1, %s14
    $region7: #{tpu_custom_call.1} parent=1 // loop_footer_branch
      %13 = sbr.rel target = $region3
    $region8: #{tpu_custom_call.1} parent=1 // loop_exit
      _
    %381 = vsyncpa [#allocation3], 1
    %s382 = scalar_lea.sflag [#allocation3], 1
    %383 = vsyncpa %s382, 1
    %384 = vsyncpa [#allocation4], 1
    %s385 = scalar_lea.sflag [#allocation4], 1
    %386 = vsyncpa %s385, 1

</llo_original>
